<compile_context>
chip_gen: v7x
topology: tpu7x:2x2x1
jax: 0.10.0
libtpu: 0.0.40
codegen_flags: <defaults>
</compile_context>

<pallas_src>
import functools

import jax
import jax.numpy as jnp
from jax.experimental import pallas as pl
from jax.experimental.pallas import tpu as pltpu


HIDDEN = 100          # logical hidden width (PyTorch Linear(..., 100))
HIDDEN_PAD = 128      # lane-aligned padded hidden width


def _round_up(x, m):
    return (x + m - 1) // m * m


def _cdiv(a, b):
    return -(-a // b)


def _mlp_kernel(x_ref, w1_ref, b1_ref, w2_ref, b2_ref, w3_ref, b3_ref, o_ref):
    # x tile: (TB, D) f32 streamed from HBM. Cast to bf16 here (free VPU work
    # under DMA/MXU slack) so the wrapper never materializes a bf16 copy.
    x = x_ref[...].astype(jnp.bfloat16)

    # layer 1: Linear(D, 100) + ReLU. K = true fingerprint dim (no x padding);
    # output cols padded 100 -> 128 with inert zero weights.
    h1 = jnp.dot(x, w1_ref[...], preferred_element_type=jnp.float32) + b1_ref[...]
    h1 = jnp.maximum(h1, 0.0)

    # layer 2: Linear(100, 100) + ReLU (padded 128x128)
    h2 = jnp.dot(h1.astype(jnp.bfloat16), w2_ref[...],
                 preferred_element_type=jnp.float32) + b2_ref[...]
    h2 = jnp.maximum(h2, 0.0)

    # layer 3: Linear(100, 1) + Sigmoid as a VPU multiply + lane reduction
    # (an MXU matmul with a single output lane would waste a full MXU pass).
    z = jnp.sum(h2 * w3_ref[...], axis=-1, keepdims=True) + b3_ref[...]
    o_ref[...] = jax.nn.sigmoid(z).astype(o_ref.dtype)


def _choose_batch_tiling(B, D, *, tb_cap, x_vmem_budget=16 << 20):
    """Pick (tb, n_tiles, B_pad).

    tb is sized so the double-buffered f32 x tile pair stays under
    `x_vmem_budget`, capped at tb_cap; tiles are then evened out so the last
    tile never carries close to a full tile of padding. For large batches we
    keep n_tiles >= 2 so megacore sharding stays active on v7x.
    """
    bytes_per_row = 4 * max(D, 1)                       # f32 x rows
    tb_max = x_vmem_budget // (2 * bytes_per_row)       # 2x double-buffered
    tb_max = max(8, min(tb_cap, (tb_max // 8) * 8))
    n_tiles = max(1, _cdiv(B, tb_max))
    if n_tiles == 1 and B >= 2048:
        n_tiles = 2                                     # keep both v7x TCs busy
    tb = _round_up(_cdiv(B, n_tiles), 8)
    return tb, n_tiles, n_tiles * tb


def _vmem_limit_bytes():
    """~Half of physical VMEM: 32 MiB on v7x (64 MiB), 64 MiB on v5e/v6e."""
    try:
        cap = int(pltpu.get_tpu_info().vmem_capacity_bytes)
    except Exception:
        cap = 64 << 20                                  # conservative default
    return int(min(cap // 2, 64 << 20))


@functools.partial(jax.jit, static_argnames=("block_b", "single_buffer_weights"))
def _forward_impl(mol_feature, params, *, block_b, single_buffer_weights):
    w1, b1, w2, b2, w3, b3 = params
    B, D = mol_feature.shape
    assert w1.shape[0] == D, "w1 must be stored as (fingerprint_dim, HIDDEN_PAD)"

    tb, n_tiles, B_pad = _choose_batch_tiling(B, D, tb_cap=block_b)

    # Only the batch axis is padded (to a multiple of tb); padded rows produce
    # sigmoid(bias) garbage that is sliced off below. No feature-dim padding
    # and no wrapper-side dtype cast -> a single f32 HBM read of x.
    x = mol_feature
    if B_pad != B:
        x = jnp.pad(x, ((0, B_pad - B), (0, 0)))

    def resident(shape):
        # Constant block index -> VMEM-resident; single-buffer when supported
        # so default double-buffering doesn't waste VMEM headroom.
        if single_buffer_weights:
            return pl.BlockSpec(shape, lambda i: (0, 0),
                                pipeline_mode=pl.Buffered(1))
        return pl.BlockSpec(shape, lambda i: (0, 0))

    cost = pl.CostEstimate(
        flops=2 * B_pad * (D * HIDDEN_PAD + HIDDEN_PAD * HIDDEN_PAD + HIDDEN_PAD),
        transcendentals=B_pad,                          # sigmoid per row
        bytes_accessed=(B_pad * D * 4 + B_pad * 4       # x in, out
                        + D * HIDDEN_PAD * 2            # w1 (bf16)
                        + HIDDEN_PAD * HIDDEN_PAD * 2   # w2 (bf16)
                        + 3 * HIDDEN_PAD * 4 + 4),      # biases + w3 row
    )

    out = pl.pallas_call(
        _mlp_kernel,
        out_shape=jax.ShapeDtypeStruct((B_pad, 1), jnp.float32),
        grid=(n_tiles,),
        in_specs=[
            pl.BlockSpec((tb, D), lambda i: (i, 0)),      # x: streamed (f32)
            resident((D, HIDDEN_PAD)),                    # w1 (bf16)
            resident((1, HIDDEN_PAD)),                    # b1
            resident((HIDDEN_PAD, HIDDEN_PAD)),           # w2 (bf16)
            resident((1, HIDDEN_PAD)),                    # b2
            resident((1, HIDDEN_PAD)),                    # w3 row
            resident((1, 1)),                             # b3
        ],
        out_specs=pl.BlockSpec((tb, 1), lambda i: (i, 0)),
        compiler_params=pltpu.CompilerParams(
            dimension_semantics=("parallel",),            # megacore on v7x
            vmem_limit_bytes=_vmem_limit_bytes(),
        ),
        cost_estimate=cost,
    )(x, w1, b1, w2, b2, w3, b3)

    return out[:B]


def discriminator_hidden_forward(mol_feature, params, *, block_b=8192):
    """Forward pass of Discriminator_hidden (reverse=False / eval mode)."""
    try:
        return _forward_impl(mol_feature, params, block_b=block_b,
                             single_buffer_weights=True)
    except Exception:
        # Pallas versions without BlockSpec(pipeline_mode=pl.Buffered(1)):
        # fall back to default double-buffered weight specs (same semantics).
        return _forward_impl(mol_feature, params, block_b=block_b,
                             single_buffer_weights=False)


def init_params(key, fingerprint_dim):
    """nn.Linear-style init (uniform +-1/sqrt(fan_in)).

    Weights stored transposed vs. PyTorch ((in, out)); hidden dim padded
    100 -> 128 (inert zeros), fingerprint dim kept unpadded; matmul weights
    in bf16, biases and the layer-3 row in f32.
    """
    ks = jax.random.split(key, 6)

    def linear(kw, kb, fan_in, fan_out):
        bound = 1.0 / jnp.sqrt(fan_in)
        w = jax.random.uniform(kw, (fan_in, fan_out), jnp.float32, -bound, bound)
        b = jax.random.uniform(kb, (fan_out,), jnp.float32, -bound, bound)
        return w, b

    w1, b1 = linear(ks[0], ks[1], fingerprint_dim, HIDDEN)
    w2, b2 = linear(ks[2], ks[3], HIDDEN, HIDDEN)
    w3, b3 = linear(ks[4], ks[5], HIDDEN, 1)

    w1p = jnp.zeros((fingerprint_dim, HIDDEN_PAD), jnp.float32).at[:, :HIDDEN].set(w1)
    b1p = jnp.zeros((1, HIDDEN_PAD), jnp.float32).at[0, :HIDDEN].set(b1)
    w2p = jnp.zeros((HIDDEN_PAD, HIDDEN_PAD), jnp.float32).at[:HIDDEN, :HIDDEN].set(w2)
    b2p = jnp.zeros((1, HIDDEN_PAD), jnp.float32).at[0, :HIDDEN].set(b2)
    w3p = jnp.zeros((1, HIDDEN_PAD), jnp.float32).at[0, :HIDDEN].set(w3[:, 0])
    b3p = b3.reshape(1, 1)

    return (w1p.astype(jnp.bfloat16), b1p,
            w2p.astype(jnp.bfloat16), b2p,
            w3p, b3p)


def _reference_forward(x, params):
    """Pure-JAX reference with the same bf16-input / f32-accumulate math."""
    w1, b1, w2, b2, w3, b3 = params
    xb = x.astype(jnp.bfloat16)
    h1 = jnp.maximum(
        jnp.dot(xb, w1, preferred_element_type=jnp.float32) + b1, 0.0)
    h2 = jnp.maximum(
        jnp.dot(h1.astype(jnp.bfloat16), w2, preferred_element_type=jnp.float32) + b2, 0.0)
    z = jnp.sum(h2 * w3, axis=-1, keepdims=True) + b3
    return jax.nn.sigmoid(z)


if __name__ == "__main__":
    key = jax.random.PRNGKey(0)
    k_x, k_p = jax.random.split(key)

    batch = 8
    fingerprint_dim = 32

    mol_feature = jax.random.normal(k_x, (batch, fingerprint_dim), jnp.float32)
    params = init_params(k_p, fingerprint_dim)

    out = discriminator_hidden_forward(mol_feature, params)
    out = jax.block_until_ready(out)

    ref = _reference_forward(mol_feature, params)
    assert out.shape == (batch, 1)
    assert jnp.allclose(out, ref, atol=2e-3, rtol=0.0)

    print("KERNEL_OK")
</pallas_src>

<mosaic_0001>
module attributes {stable_mosaic.version = 11 : i64} {
  func.func @_mlp_kernel(%arg0: i32, %arg1: memref<8x32xf32, #tpu.memory_space<vmem>>, %arg2: memref<32x128xbf16, #tpu.memory_space<vmem>>, %arg3: memref<1x128xf32, #tpu.memory_space<vmem>>, %arg4: memref<128x128xbf16, #tpu.memory_space<vmem>>, %arg5: memref<1x128xf32, #tpu.memory_space<vmem>>, %arg6: memref<1x128xf32, #tpu.memory_space<vmem>>, %arg7: memref<1x1xf32, #tpu.memory_space<vmem>>, %arg8: memref<8x1xf32, #tpu.memory_space<vmem>>) attributes {dimension_semantics = [#tpu.dimension_semantics<parallel>], iteration_bounds = array<i64: 1>, scalar_prefetch = 0 : i64, scratch_operands = 0 : i64, tpu.core_type = #tpu.core_type<tc>, window_params = [{transform_indices = @transform_0, window_bounds = array<i64: 8, 32>}, {pipeline_mode = #tpu.pipeline_mode<synchronous>, transform_indices = @transform_1, window_bounds = array<i64: 32, 128>}, {pipeline_mode = #tpu.pipeline_mode<synchronous>, transform_indices = @transform_2, window_bounds = array<i64: 1, 128>}, {pipeline_mode = #tpu.pipeline_mode<synchronous>, transform_indices = @transform_3, window_bounds = array<i64: 128, 128>}, {pipeline_mode = #tpu.pipeline_mode<synchronous>, transform_indices = @transform_4, window_bounds = array<i64: 1, 128>}, {pipeline_mode = #tpu.pipeline_mode<synchronous>, transform_indices = @transform_5, window_bounds = array<i64: 1, 128>}, {pipeline_mode = #tpu.pipeline_mode<synchronous>, transform_indices = @transform_6, window_bounds = array<i64: 1, 1>}, {transform_indices = @transform_7, window_bounds = array<i64: 8, 1>}]} {
    %c0 = arith.constant 0 : index
    %c0_0 = arith.constant 0 : index
    %0 = vector.load %arg1[%c0, %c0_0] : memref<8x32xf32, #tpu.memory_space<vmem>>, vector<8x32xf32>
    %1 = arith.truncf %0 : vector<8x32xf32> to vector<8x32xbf16>
    %c0_1 = arith.constant 0 : index
    %c0_2 = arith.constant 0 : index
    %2 = vector.load %arg2[%c0_1, %c0_2] : memref<32x128xbf16, #tpu.memory_space<vmem>>, vector<32x128xbf16>
    %cst = arith.constant dense<0.000000e+00> : vector<8x128xf32>
    %3 = tpu.matmul %1, %2, %cst {dimension_numbers = #tpu.dot_dimension_numbers<[1], [0], [0], [1], [0, 0, 1, 1], [], []>} : vector<8x32xbf16>, vector<32x128xbf16>, vector<8x128xf32> -> vector<8x128xf32>
    %c0_3 = arith.constant 0 : index
    %c0_4 = arith.constant 0 : index
    %4 = vector.load %arg3[%c0_3, %c0_4] : memref<1x128xf32, #tpu.memory_space<vmem>>, vector<1x128xf32>
    %5 = vector.broadcast %4 : vector<1x128xf32> to vector<8x128xf32>
    %6 = arith.addf %3, %5 : vector<8x128xf32>
    %cst_5 = arith.constant 0.000000e+00 : f32
    %7 = vector.broadcast %cst_5 : f32 to vector<8x128xf32>
    %8 = arith.maximumf %6, %7 : vector<8x128xf32>
    %9 = arith.truncf %8 : vector<8x128xf32> to vector<8x128xbf16>
    %c0_6 = arith.constant 0 : index
    %c0_7 = arith.constant 0 : index
    %10 = vector.load %arg4[%c0_6, %c0_7] : memref<128x128xbf16, #tpu.memory_space<vmem>>, vector<128x128xbf16>
    %cst_8 = arith.constant dense<0.000000e+00> : vector<8x128xf32>
    %11 = tpu.matmul %9, %10, %cst_8 {dimension_numbers = #tpu.dot_dimension_numbers<[1], [0], [0], [1], [0, 0, 1, 1], [], []>} : vector<8x128xbf16>, vector<128x128xbf16>, vector<8x128xf32> -> vector<8x128xf32>
    %c0_9 = arith.constant 0 : index
    %c0_10 = arith.constant 0 : index
    %12 = vector.load %arg5[%c0_9, %c0_10] : memref<1x128xf32, #tpu.memory_space<vmem>>, vector<1x128xf32>
    %13 = vector.broadcast %12 : vector<1x128xf32> to vector<8x128xf32>
    %14 = arith.addf %11, %13 : vector<8x128xf32>
    %cst_11 = arith.constant 0.000000e+00 : f32
    %15 = vector.broadcast %cst_11 : f32 to vector<8x128xf32>
    %16 = arith.maximumf %14, %15 : vector<8x128xf32>
    %c0_12 = arith.constant 0 : index
    %c0_13 = arith.constant 0 : index
    %17 = vector.load %arg6[%c0_12, %c0_13] : memref<1x128xf32, #tpu.memory_space<vmem>>, vector<1x128xf32>
    %18 = vector.broadcast %17 : vector<1x128xf32> to vector<8x128xf32>
    %19 = arith.mulf %16, %18 : vector<8x128xf32>
    %cst_14 = arith.constant dense<0.000000e+00> : vector<8xf32>
    %20 = vector.multi_reduction <add>, %19, %cst_14 [1] : vector<8x128xf32> to vector<8xf32>
    %21 = vector.shape_cast %20 : vector<8xf32> to vector<8x1xf32>
    %c0_15 = arith.constant 0 : index
    %c0_16 = arith.constant 0 : index
    %22 = vector.load %arg7[%c0_15, %c0_16] : memref<1x1xf32, #tpu.memory_space<vmem>>, vector<1x1xf32>
    %23 = vector.broadcast %22 : vector<1x1xf32> to vector<8x1xf32>
    %24 = arith.addf %21, %23 : vector<8x1xf32>
    %25 = arith.negf %24 : vector<8x1xf32>
    %26 = math.exp %25 : vector<8x1xf32>
    %cst_17 = arith.constant 1.000000e+00 : f32
    %27 = vector.broadcast %cst_17 : f32 to vector<8x1xf32>
    %28 = arith.addf %27, %26 : vector<8x1xf32>
    %29 = arith.divf %27, %28 : vector<8x1xf32>
    %c0_18 = arith.constant 0 : index
    %c0_19 = arith.constant 0 : index
    %30 = vector.load %arg8[%c0_18, %c0_19] : memref<8x1xf32, #tpu.memory_space<vmem>>, vector<8x1xf32>
    tpu.vector_store %arg8[%c0_18, %c0_19], %29 {strides = array<i32>} : memref<8x1xf32, #tpu.memory_space<vmem>>, vector<8x1xf32>,
    return
  }
  func.func @transform_0(%arg0: i32) -> (i32, i32) {
    %c0_i32 = arith.constant 0 : i32
    %c0_i32_0 = arith.constant 0 : i32
    return %arg0, %c0_i32 : i32, i32
  }
  func.func @transform_1(%arg0: i32) -> (i32, i32) {
    %c0_i32 = arith.constant 0 : i32
    %c0_i32_0 = arith.constant 0 : i32
    %c0_i32_1 = arith.constant 0 : i32
    return %c0_i32, %c0_i32_0 : i32, i32
  }
  func.func @transform_2(%arg0: i32) -> (i32, i32) {
    %c0_i32 = arith.constant 0 : i32
    %c0_i32_0 = arith.constant 0 : i32
    %c0_i32_1 = arith.constant 0 : i32
    return %c0_i32, %c0_i32_0 : i32, i32
  }
  func.func @transform_3(%arg0: i32) -> (i32, i32) {
    %c0_i32 = arith.constant 0 : i32
    %c0_i32_0 = arith.constant 0 : i32
    %c0_i32_1 = arith.constant 0 : i32
    return %c0_i32, %c0_i32_0 : i32, i32
  }
  func.func @transform_4(%arg0: i32) -> (i32, i32) {
    %c0_i32 = arith.constant 0 : i32
    %c0_i32_0 = arith.constant 0 : i32
    %c0_i32_1 = arith.constant 0 : i32
    return %c0_i32, %c0_i32_0 : i32, i32
  }
  func.func @transform_5(%arg0: i32) -> (i32, i32) {
    %c0_i32 = arith.constant 0 : i32
    %c0_i32_0 = arith.constant 0 : i32
    %c0_i32_1 = arith.constant 0 : i32
    return %c0_i32, %c0_i32_0 : i32, i32
  }
  func.func @transform_6(%arg0: i32) -> (i32, i32) {
    %c0_i32 = arith.constant 0 : i32
    %c0_i32_0 = arith.constant 0 : i32
    %c0_i32_1 = arith.constant 0 : i32
    return %c0_i32, %c0_i32_0 : i32, i32
  }
  func.func @transform_7(%arg0: i32) -> (i32, i32) {
    %c0_i32 = arith.constant 0 : i32
    %c0_i32_0 = arith.constant 0 : i32
    return %arg0, %c0_i32 : i32, i32
  }
}

module attributes {stable_mosaic.version = 11 : i64} {
  func.func @_mlp_kernel(%arg0: i32, %arg1: memref<8x32xf32, #tpu.memory_space<vmem>>, %arg2: memref<32x128xbf16, #tpu.memory_space<vmem>>, %arg3: memref<1x128xf32, #tpu.memory_space<vmem>>, %arg4: memref<128x128xbf16, #tpu.memory_space<vmem>>, %arg5: memref<1x128xf32, #tpu.memory_space<vmem>>, %arg6: memref<1x128xf32, #tpu.memory_space<vmem>>, %arg7: memref<1x1xf32, #tpu.memory_space<vmem>>, %arg8: memref<8x1xf32, #tpu.memory_space<vmem>>) attributes {dimension_semantics = [#tpu.dimension_semantics<parallel>], iteration_bounds = array<i64: 1>, scalar_prefetch = 0 : i64, scratch_operands = 0 : i64, tpu.core_type = #tpu.core_type<tc>, window_params = [{transform_indices = @transform_0, window_bounds = array<i64: 8, 32>}, {pipeline_mode = #tpu.pipeline_mode<synchronous>, transform_indices = @transform_1, window_bounds = array<i64: 32, 128>}, {pipeline_mode = #tpu.pipeline_mode<synchronous>, transform_indices = @transform_2, window_bounds = array<i64: 1, 128>}, {pipeline_mode = #tpu.pipeline_mode<synchronous>, transform_indices = @transform_3, window_bounds = array<i64: 128, 128>}, {pipeline_mode = #tpu.pipeline_mode<synchronous>, transform_indices = @transform_4, window_bounds = array<i64: 1, 128>}, {pipeline_mode = #tpu.pipeline_mode<synchronous>, transform_indices = @transform_5, window_bounds = array<i64: 1, 128>}, {pipeline_mode = #tpu.pipeline_mode<synchronous>, transform_indices = @transform_6, window_bounds = array<i64: 1, 1>}, {transform_indices = @transform_7, window_bounds = array<i64: 8, 1>}]} {
    %c0 = arith.constant 0 : index
    %c0_0 = arith.constant 0 : index
    %0 = vector.load %arg1[%c0, %c0_0] : memref<8x32xf32, #tpu.memory_space<vmem>>, vector<8x32xf32>
    %1 = arith.truncf %0 : vector<8x32xf32> to vector<8x32xbf16>
    %c0_1 = arith.constant 0 : index
    %c0_2 = arith.constant 0 : index
    %2 = vector.load %arg2[%c0_1, %c0_2] : memref<32x128xbf16, #tpu.memory_space<vmem>>, vector<32x128xbf16>
    %cst = arith.constant dense<0.000000e+00> : vector<8x128xf32>
    %3 = tpu.matmul %1, %2, %cst {dimension_numbers = #tpu.dot_dimension_numbers<[1], [0], [0], [1], [0, 0, 1, 1], [], []>} : vector<8x32xbf16>, vector<32x128xbf16>, vector<8x128xf32> -> vector<8x128xf32>
    %c0_3 = arith.constant 0 : index
    %c0_4 = arith.constant 0 : index
    %4 = vector.load %arg3[%c0_3, %c0_4] : memref<1x128xf32, #tpu.memory_space<vmem>>, vector<1x128xf32>
    %5 = vector.broadcast %4 : vector<1x128xf32> to vector<8x128xf32>
    %6 = arith.addf %3, %5 : vector<8x128xf32>
    %cst_5 = arith.constant 0.000000e+00 : f32
    %7 = vector.broadcast %cst_5 : f32 to vector<8x128xf32>
    %8 = arith.maximumf %6, %7 : vector<8x128xf32>
    %9 = arith.truncf %8 : vector<8x128xf32> to vector<8x128xbf16>
    %c0_6 = arith.constant 0 : index
    %c0_7 = arith.constant 0 : index
    %10 = vector.load %arg4[%c0_6, %c0_7] : memref<128x128xbf16, #tpu.memory_space<vmem>>, vector<128x128xbf16>
    %cst_8 = arith.constant dense<0.000000e+00> : vector<8x128xf32>
    %11 = tpu.matmul %9, %10, %cst_8 {dimension_numbers = #tpu.dot_dimension_numbers<[1], [0], [0], [1], [0, 0, 1, 1], [], []>} : vector<8x128xbf16>, vector<128x128xbf16>, vector<8x128xf32> -> vector<8x128xf32>
    %c0_9 = arith.constant 0 : index
    %c0_10 = arith.constant 0 : index
    %12 = vector.load %arg5[%c0_9, %c0_10] : memref<1x128xf32, #tpu.memory_space<vmem>>, vector<1x128xf32>
    %13 = vector.broadcast %12 : vector<1x128xf32> to vector<8x128xf32>
    %14 = arith.addf %11, %13 : vector<8x128xf32>
    %cst_11 = arith.constant 0.000000e+00 : f32
    %15 = vector.broadcast %cst_11 : f32 to vector<8x128xf32>
    %16 = arith.maximumf %14, %15 : vector<8x128xf32>
    %c0_12 = arith.constant 0 : index
    %c0_13 = arith.constant 0 : index
    %17 = vector.load %arg6[%c0_12, %c0_13] : memref<1x128xf32, #tpu.memory_space<vmem>>, vector<1x128xf32>
    %18 = vector.broadcast %17 : vector<1x128xf32> to vector<8x128xf32>
    %19 = arith.mulf %16, %18 : vector<8x128xf32>
    %cst_14 = arith.constant dense<0.000000e+00> : vector<8xf32>
    %20 = vector.multi_reduction <add>, %19, %cst_14 [1] : vector<8x128xf32> to vector<8xf32>
    %21 = vector.shape_cast %20 : vector<8xf32> to vector<8x1xf32>
    %c0_15 = arith.constant 0 : index
    %c0_16 = arith.constant 0 : index
    %22 = vector.load %arg7[%c0_15, %c0_16] : memref<1x1xf32, #tpu.memory_space<vmem>>, vector<1x1xf32>
    %23 = vector.broadcast %22 : vector<1x1xf32> to vector<8x1xf32>
    %24 = arith.addf %21, %23 : vector<8x1xf32>
    %25 = arith.negf %24 : vector<8x1xf32>
    %26 = math.exp %25 : vector<8x1xf32>
    %cst_17 = arith.constant 1.000000e+00 : f32
    %27 = vector.broadcast %cst_17 : f32 to vector<8x1xf32>
    %28 = arith.addf %27, %26 : vector<8x1xf32>
    %29 = arith.divf %27, %28 : vector<8x1xf32>
    %c0_18 = arith.constant 0 : index
    %c0_19 = arith.constant 0 : index
    %30 = vector.load %arg8[%c0_18, %c0_19] : memref<8x1xf32, #tpu.memory_space<vmem>>, vector<8x1xf32>
    tpu.vector_store %arg8[%c0_18, %c0_19], %29 {strides = array<i32>} : memref<8x1xf32, #tpu.memory_space<vmem>>, vector<8x1xf32>,
    return
  }
  func.func @transform_0(%arg0: i32) -> (i32, i32) {
    %c0_i32 = arith.constant 0 : i32
    %c0_i32_0 = arith.constant 0 : i32
    return %arg0, %c0_i32 : i32, i32
  }
  func.func @transform_1(%arg0: i32) -> (i32, i32) {
    %c0_i32 = arith.constant 0 : i32
    %c0_i32_0 = arith.constant 0 : i32
    %c0_i32_1 = arith.constant 0 : i32
    return %c0_i32, %c0_i32_0 : i32, i32
  }
  func.func @transform_2(%arg0: i32) -> (i32, i32) {
    %c0_i32 = arith.constant 0 : i32
    %c0_i32_0 = arith.constant 0 : i32
    %c0_i32_1 = arith.constant 0 : i32
    return %c0_i32, %c0_i32_0 : i32, i32
  }
  func.func @transform_3(%arg0: i32) -> (i32, i32) {
    %c0_i32 = arith.constant 0 : i32
    %c0_i32_0 = arith.constant 0 : i32
    %c0_i32_1 = arith.constant 0 : i32
    return %c0_i32, %c0_i32_0 : i32, i32
  }
  func.func @transform_4(%arg0: i32) -> (i32, i32) {
    %c0_i32 = arith.constant 0 : i32
    %c0_i32_0 = arith.constant 0 : i32
    %c0_i32_1 = arith.constant 0 : i32
    return %c0_i32, %c0_i32_0 : i32, i32
  }
  func.func @transform_5(%arg0: i32) -> (i32, i32) {
    %c0_i32 = arith.constant 0 : i32
    %c0_i32_0 = arith.constant 0 : i32
    %c0_i32_1 = arith.constant 0 : i32
    return %c0_i32, %c0_i32_0 : i32, i32
  }
  func.func @transform_6(%arg0: i32) -> (i32, i32) {
    %c0_i32 = arith.constant 0 : i32
    %c0_i32_0 = arith.constant 0 : i32
    %c0_i32_1 = arith.constant 0 : i32
    return %c0_i32, %c0_i32_0 : i32, i32
  }
  func.func @transform_7(%arg0: i32) -> (i32, i32) {
    %c0_i32 = arith.constant 0 : i32
    %c0_i32_0 = arith.constant 0 : i32
    return %arg0, %c0_i32 : i32, i32
  }
}

</mosaic_0001>

<llo_original>
// kernel: _forward_impl.1
$region0: #{_forward_impl.1}
  #allocation0 [shape = 'u32[]', space=smem, size = 0x4, offset = 0x4, fixed_abs, tag = 'smem constant byte address 0x4 - core index']
  #allocation1 [shape = 'u32[144,128]{1,0:T(1,128)}', space=vmem, size = 0x12000, scoped, tag = 'internal scratch']
  #allocation2 [shape = 'f32[1,1]{1,0:T(1,128)S(1)}', space=vmem, size = 0x200, scoped, tag = 'scoped memory for _forward_impl.1']
  %s0 = inlined_call_operand.hbm [shape: f32[8,32], index: 0, kind: input, shape index: {}]
  %s1 = inlined_call_operand.hbm [shape: bf16[32,128], index: 1, kind: input, shape index: {}]
  %s2 = inlined_call_operand.vmem [shape: f32[1,128], index: 2, kind: input, shape index: {}]
  %s3 = inlined_call_operand.hbm [shape: bf16[128,128], index: 3, kind: input, shape index: {}]
  %s4 = inlined_call_operand.vmem [shape: f32[1,128], index: 4, kind: input, shape index: {}]
  %s5 = inlined_call_operand.vmem [shape: f32[1,128], index: 5, kind: input, shape index: {}]
  %s6 = inlined_call_operand.<no memory space> [shape: f32[1,1], index: 6, kind: input, shape index: {}]
  %s7 = inlined_call_operand.vmem [shape: f32[8,1], index: 7, kind: output, shape index: {}]
  %s8 = sld [smem:[#allocation0]]
  $region50: #{_forward_impl.1} parent=0
    _
  %s10 = ssub.s32 1, %s8
  %s11 = scalar_select 0, %s10, %s8
  %v12 = vstv %s6
  %13 = vst [vmem:[#allocation2] sm:$0x1] %v12
  $region1: #{_forward_impl.1} parent=0
    #allocation3 [shape = 'u8[4096]{0}', space=vmem, size = 0x1000, scoped, tag = 'input window, operand 0, single buffered']
    #allocation4 [shape = 's32[1]{0}', space=sflag, size = 0x4, scoped, tag = 'scoped memory for _forward_impl.1']
    #allocation5 [shape = 'u8[8192]{0}', space=vmem, size = 0x2000, scoped, tag = 'input window, operand 1, single buffered']
    #allocation6 [shape = 's32[1]{0}', space=sflag, size = 0x4, scoped, tag = 'scoped memory for _forward_impl.1']
    #allocation7 [shape = 'u8[32768]{0}', space=vmem, size = 0x8000, scoped, tag = 'input window, operand 3, single buffered']
    %14 = vsyncpa [#allocation4], 0
    %15 = vsyncpa [#allocation6], 0
    // Predicated region
    $region2: #{_forward_impl.1} parent=1 // pred_check
      _
    $region3: #{_forward_impl.1} parent=1 // pred_check_branch
      %17 = sbr.rel (0) target = $region5
    $region4: #{_forward_impl.1} parent=1 // pred_region
      %s19 = ssub.s32 128, 128
      %20 = vsyncadd [#allocation4], %s19
      %s22 = sshll.u32 [#allocation3], 4
      %s23 = int_to_ptr.vmem [resolvable:$true] %s22
      %25 = dma.hbm_to_vmem [thread:$0]  %s0, 128, %s23, [#allocation4]
    $region5: #{_forward_impl.1} parent=1 // pred_fallthru
      _
    // Predicated region
    $region6: #{_forward_impl.1} parent=1 // pred_check
      _
    $region7: #{_forward_impl.1} parent=1 // pred_check_branch
      %27 = sbr.rel (0) target = $region9
    $region8: #{_forward_impl.1} parent=1 // pred_region
      %s29 = ssub.s32 256, 256
      %30 = vsyncadd [#allocation6], %s29
      %s31 = sshll.u32 [#allocation5], 4
      %s32 = int_to_ptr.vmem [resolvable:$true] %s31
      %37 = dma.hbm_to_vmem [thread:$0]  %s1, 256, %s32, [#allocation6], 64, 64, 4
    $region9: #{_forward_impl.1} parent=1 // pred_fallthru
      _
    // Predicated region
    $region10: #{_forward_impl.1} parent=1 // pred_check
      _
    $region11: #{_forward_impl.1} parent=1 // pred_check_branch
      %39 = sbr.rel (0) target = $region13
    $region12: #{_forward_impl.1} parent=1 // pred_region
      _
    $region13: #{_forward_impl.1} parent=1 // pred_fallthru
      _
    // Predicated region
    $region14: #{_forward_impl.1} parent=1 // pred_check
      _
    $region15: #{_forward_impl.1} parent=1 // pred_check_branch
      %41 = sbr.rel (0) target = $region17
    $region16: #{_forward_impl.1} parent=1 // pred_region
      %s43 = ssub.s32 1024, 1024
      %44 = vsyncadd [#allocation6], %s43
      %s45 = sshll.u32 [#allocation7], 4
      %s46 = int_to_ptr.vmem [resolvable:$true] %s45
      %51 = dma.hbm_to_vmem [thread:$0]  %s3, 1024, %s46, [#allocation6], 64, 64, 4
    $region17: #{_forward_impl.1} parent=1 // pred_fallthru
      _
    // Predicated region
    $region18: #{_forward_impl.1} parent=1 // pred_check
      _
    $region19: #{_forward_impl.1} parent=1 // pred_check_branch
      %53 = sbr.rel (0) target = $region21
    $region20: #{_forward_impl.1} parent=1 // pred_region
      _
    $region21: #{_forward_impl.1} parent=1 // pred_fallthru
      _
    // Predicated region
    $region22: #{_forward_impl.1} parent=1 // pred_check
      _
    $region23: #{_forward_impl.1} parent=1 // pred_check_branch
      %55 = sbr.rel (0) target = $region25
    $region24: #{_forward_impl.1} parent=1 // pred_region
      _
    $region25: #{_forward_impl.1} parent=1 // pred_fallthru
      _
    // Predicated region
    $region26: #{_forward_impl.1} parent=1 // pred_check
      _
    $region27: #{_forward_impl.1} parent=1 // pred_check_branch
      %57 = sbr.rel (0) target = $region29
    $region28: #{_forward_impl.1} parent=1 // pred_region
      _
    $region29: #{_forward_impl.1} parent=1 // pred_fallthru
      _
    // Predicated region
    $region30: #{_forward_impl.1} parent=1 // pred_check
      _
    $region31: #{_forward_impl.1} parent=1 // pred_check_branch
      %59 = sbr.rel (0) target = $region33
    $region32: #{_forward_impl.1} parent=1 // pred_region
      %60 = dma.done [#allocation4], 128
    $region33: #{_forward_impl.1} parent=1 // pred_fallthru
      _
    // Predicated region
    $region34: #{_forward_impl.1} parent=1 // pred_check
      _
    $region35: #{_forward_impl.1} parent=1 // pred_check_branch
      %62 = sbr.rel (0) target = $region37
    $region36: #{_forward_impl.1} parent=1 // pred_region
      %63 = dma.done [#allocation6], 256
    $region37: #{_forward_impl.1} parent=1 // pred_fallthru
      _
    // Predicated region
    $region38: #{_forward_impl.1} parent=1 // pred_check
      _
    $region39: #{_forward_impl.1} parent=1 // pred_check_branch
      %65 = sbr.rel (0) target = $region41
    $region40: #{_forward_impl.1} parent=1 // pred_region
      %66 = dma.done [#allocation6], 1024
    $region41: #{_forward_impl.1} parent=1 // pred_fallthru
      _
    %v68 = vld [vmem:[#allocation3] sm:$0xff]
    %v69 = vpack.c.bf16 %v68, %v68
    %v70 = vld [vmem:[#allocation5] sm:$0xf]
    %v71 = vld [vmem:[#allocation5 + $0x4] sm:$0xf]
    %v72 = vld [vmem:[#allocation5 + $0x8] sm:$0xf]
    %v73 = vld [vmem:[#allocation5 + $0xc] sm:$0xf]
    %v74 = vld [vmem:[%s2] sm:$0x1]
    %v76 = vlaneseq
    %v77 = vshrl.u32 %v76, 7
    %v78 = vsub.s32 0, %v77
    %v79 = vrot.slane %v74, %v78
    %v85 = vunpack.c.l.b16 %v70
    %v86 = vunpack.c.l.b16 %v71
    %v87 = vunpack.c.l.b16 %v72
    %v88 = vunpack.c.l.b16 %v73
    %v89 = vpack.c.b16 %v86, %v85
    %v90 = vpack.c.b16 %v88, %v87
    %vm93 = vcmask 261120
    %v95 = vsel %vm93, %v69, 0
    %97 = vmatprep.subr.bf16.mxu0 0
    %98 = vmatpush1.bf16.msra.mxu0 %v89
    %99 = vmatprep.subr.bf16.mxu0 0
    %100 = vmatpush1.bf16.msra.mxu0 %v90
    %101 = vmatprep.subr.bf16.mxu0 0
    %102 = vmatpush1.bf16.msra.mxu0 0
    %103 = vmatprep.subr.bf16.mxu0 0
    %104 = vmatpush1.bf16.msra.mxu0 0
    %105 = vmatprep.subr.bf16.mxu0 0
    %106 = vmatpush1.bf16.msra.mxu0 0
    %107 = vmatprep.subr.bf16.mxu0 0
    %108 = vmatpush1.bf16.msra.mxu0 0
    %109 = vmatprep.subr.bf16.mxu0 0
    %110 = vmatpush1.bf16.msra.mxu0 0
    %111 = vmatprep.subr.bf16.mxu0 0
    %112 = vmatpush1.bf16.msra.mxu0 0
    %113 = vmatprep.subr.bf16.mxu0 0
    %114 = vmatpush1.bf16.msra.mxu0 0
    %115 = vmatprep.subr.bf16.mxu0 0
    %116 = vmatpush1.bf16.msra.mxu0 0
    %117 = vmatprep.subr.bf16.mxu0 0
    %118 = vmatpush1.bf16.msra.mxu0 0
    %119 = vmatprep.subr.bf16.mxu0 0
    %120 = vmatpush1.bf16.msra.mxu0 0
    %121 = vmatprep.subr.bf16.mxu0 0
    %122 = vmatpush1.bf16.msra.mxu0 0
    %123 = vmatprep.subr.bf16.mxu0 0
    %124 = vmatpush1.bf16.msra.mxu0 0
    %125 = vmatprep.subr.bf16.mxu0 0
    %126 = vmatpush1.bf16.msra.mxu0 0
    %127 = vmatprep.subr.bf16.mxu0 0
    %128 = vmatpush1.bf16.msra.mxu0 0
    %129 = vmatprep.mubr.bf16.mxu0 0
    %130 = vmatmul.mubr.bf16.gmra.mrb[0].mxu0 %v95
    %v131 = vpop.f32.mrb[0].mxu0
    %v132 = vadd.f32 %v79, %v131
    %v133 = vpop.f32.mrb[0].mxu0
    %v134 = vpop.f32.mrb[0].mxu0
    %v135 = vpop.f32.mrb[0].mxu0
    %136 = vdwg.mxu0
    %v137 = vmax.f32 %v132, 0.0
    %v138 = vpack.c.bf16 %v137, %v137
    %v139 = vld [vmem:[#allocation7] sm:$0xf]
    %v140 = vld [vmem:[#allocation7 + $0x4] sm:$0xf]
    %v141 = vld [vmem:[#allocation7 + $0x8] sm:$0xf]
    %v142 = vld [vmem:[#allocation7 + $0xc] sm:$0xf]
    %v143 = vld [vmem:[#allocation7 + $0x10] sm:$0xf]
    %v144 = vld [vmem:[#allocation7 + $0x14] sm:$0xf]
    %v145 = vld [vmem:[#allocation7 + $0x18] sm:$0xf]
    %v146 = vld [vmem:[#allocation7 + $0x1c] sm:$0xf]
    %v147 = vld [vmem:[#allocation7 + $0x20] sm:$0xf]
    %v148 = vld [vmem:[#allocation7 + $0x24] sm:$0xf]
    %v149 = vld [vmem:[#allocation7 + $0x28] sm:$0xf]
    %v150 = vld [vmem:[#allocation7 + $0x2c] sm:$0xf]
    %v151 = vld [vmem:[#allocation7 + $0x30] sm:$0xf]
    %v152 = vld [vmem:[#allocation7 + $0x34] sm:$0xf]
    %v153 = vld [vmem:[#allocation7 + $0x38] sm:$0xf]
    %v154 = vld [vmem:[#allocation7 + $0x3c] sm:$0xf]
    %v155 = vld [vmem:[%s4] sm:$0x1]
    %v157 = vlaneseq
    %v158 = vshrl.u32 %v157, 7
    %v159 = vsub.s32 0, %v158
    %v160 = vrot.slane %v155, %v159
    %v178 = vunpack.c.l.b16 %v139
    %v179 = vunpack.c.l.b16 %v140
    %v180 = vunpack.c.l.b16 %v141
    %v181 = vunpack.c.l.b16 %v142
    %v182 = vunpack.c.l.b16 %v143
    %v183 = vunpack.c.l.b16 %v144
    %v184 = vunpack.c.l.b16 %v145
    %v185 = vunpack.c.l.b16 %v146
    %v186 = vunpack.c.l.b16 %v147
    %v187 = vunpack.c.l.b16 %v148
    %v188 = vunpack.c.l.b16 %v149
    %v189 = vunpack.c.l.b16 %v150
    %v190 = vunpack.c.l.b16 %v151
    %v191 = vunpack.c.l.b16 %v152
    %v192 = vunpack.c.l.b16 %v153
    %v193 = vunpack.c.l.b16 %v154
    %v194 = vpack.c.b16 %v179, %v178
    %v195 = vpack.c.b16 %v181, %v180
    %v196 = vpack.c.b16 %v183, %v182
    %v197 = vpack.c.b16 %v185, %v184
    %v198 = vpack.c.b16 %v187, %v186
    %v199 = vpack.c.b16 %v189, %v188
    %v200 = vpack.c.b16 %v191, %v190
    %v201 = vpack.c.b16 %v193, %v192
    %210 = vmatprep.subr.bf16.mxu0 0
    %211 = vmatpush1.bf16.msra.mxu0 %v194
    %212 = vmatprep.subr.bf16.mxu0 0
    %213 = vmatpush1.bf16.msra.mxu0 %v195
    %214 = vmatprep.subr.bf16.mxu0 0
    %215 = vmatpush1.bf16.msra.mxu0 %v196
    %216 = vmatprep.subr.bf16.mxu0 0
    %217 = vmatpush1.bf16.msra.mxu0 %v197
    %218 = vmatprep.subr.bf16.mxu0 0
    %219 = vmatpush1.bf16.msra.mxu0 %v198
    %220 = vmatprep.subr.bf16.mxu0 0
    %221 = vmatpush1.bf16.msra.mxu0 %v199
    %222 = vmatprep.subr.bf16.mxu0 0
    %223 = vmatpush1.bf16.msra.mxu0 %v200
    %224 = vmatprep.subr.bf16.mxu0 0
    %225 = vmatpush1.bf16.msra.mxu0 %v201
    %226 = vmatprep.subr.bf16.mxu0 0
    %227 = vmatpush1.bf16.msra.mxu0 0
    %228 = vmatprep.subr.bf16.mxu0 0
    %229 = vmatpush1.bf16.msra.mxu0 0
    %230 = vmatprep.subr.bf16.mxu0 0
    %231 = vmatpush1.bf16.msra.mxu0 0
    %232 = vmatprep.subr.bf16.mxu0 0
    %233 = vmatpush1.bf16.msra.mxu0 0
    %234 = vmatprep.subr.bf16.mxu0 0
    %235 = vmatpush1.bf16.msra.mxu0 0
    %236 = vmatprep.subr.bf16.mxu0 0
    %237 = vmatpush1.bf16.msra.mxu0 0
    %238 = vmatprep.subr.bf16.mxu0 0
    %239 = vmatpush1.bf16.msra.mxu0 0
    %240 = vmatprep.subr.bf16.mxu0 0
    %241 = vmatpush1.bf16.msra.mxu0 0
    %242 = vmatprep.mubr.bf16.mxu0 0
    %243 = vmatmul.mubr.bf16.gmra.mrb[0].mxu0 %v138
    %v244 = vpop.f32.mrb[0].mxu0
    %v245 = vadd.f32 %v160, %v244
    %v246 = vpop.f32.mrb[0].mxu0
    %v247 = vpop.f32.mrb[0].mxu0
    %v248 = vpop.f32.mrb[0].mxu0
    %249 = vdwg.mxu0
    %v250 = vmax.f32 %v245, 0.0
    %v251 = vld [vmem:[%s5] sm:$0x1]
    %v253 = vlaneseq
    %v254 = vshrl.u32 %v253, 7
    %v255 = vsub.s32 0, %v254
    %v256 = vrot.slane %v251, %v255
    %v258 = vmul.f32 %v250, %v256
    %259 = vadd.xlane.f32.xlu0 %v258
    %v260 = vpop.xlane.xlu0 %259
    %v261 = vld [vmem:[#allocation2] sm:$0x1]
    %v263 = vlaneseq
    %v264 = vshrl.u32 %v263, 7
    %v265 = vsub.s32 0, %v264
    %v266 = vrot.slane %v261, %v265
    %v268 = vadd.f32 %v260, %v266
    %v269 = vxor.u32 %v268, 2147483648
    %v270 = vmul.f32 %v269, 1.442695
    %v271 = vpow.pop %v270
    %v272 = vadd.f32 %v271, 1.0
    %v273 = vrcp.pop %v272
    %v274 = vmul.f32 1.0, %v273
    %vm275 = vcmask 7168
    %276 = vst.msk [vmem:[%s7] sm:$0xff] %vm275, %v274
    // Predicated region
    $region42: #{_forward_impl.1} parent=1 // pred_check
      _
    $region43: #{_forward_impl.1} parent=1 // pred_check_branch
      %278 = sbr.rel (0) target = $region45
    $region44: #{_forward_impl.1} parent=1 // pred_region
      _
    $region45: #{_forward_impl.1} parent=1 // pred_fallthru
      _
    // Predicated region
    $region46: #{_forward_impl.1} parent=1 // pred_check
      _
    $region47: #{_forward_impl.1} parent=1 // pred_check_branch
      %280 = sbr.rel (0) target = $region49
    $region48: #{_forward_impl.1} parent=1 // pred_region
      _
    $region49: #{_forward_impl.1} parent=1 // pred_fallthru
      _
    %281 = vsyncpa [#allocation4], 1
    %282 = vsyncpa [#allocation6], 1

// kernel: _forward_impl.1
$region0: #{_forward_impl.1}
  #allocation0 [shape = 'u32[]', space=smem, size = 0x4, offset = 0x4, fixed_abs, tag = 'smem constant byte address 0x4 - core index']
  #allocation1 [shape = 'u32[144,128]{1,0:T(1,128)}', space=vmem, size = 0x12000, scoped, tag = 'internal scratch']
  #allocation2 [shape = 'f32[1,1]{1,0:T(1,128)S(1)}', space=vmem, size = 0x200, scoped, tag = 'scoped memory for _forward_impl.1']
  %s0 = inlined_call_operand.hbm [shape: f32[8,32], index: 0, kind: input, shape index: {}]
  %s1 = inlined_call_operand.hbm [shape: bf16[32,128], index: 1, kind: input, shape index: {}]
  %s2 = inlined_call_operand.vmem [shape: f32[1,128], index: 2, kind: input, shape index: {}]
  %s3 = inlined_call_operand.hbm [shape: bf16[128,128], index: 3, kind: input, shape index: {}]
  %s4 = inlined_call_operand.vmem [shape: f32[1,128], index: 4, kind: input, shape index: {}]
  %s5 = inlined_call_operand.vmem [shape: f32[1,128], index: 5, kind: input, shape index: {}]
  %s6 = inlined_call_operand.<no memory space> [shape: f32[1,1], index: 6, kind: input, shape index: {}]
  %s7 = inlined_call_operand.vmem [shape: f32[8,1], index: 7, kind: output, shape index: {}]
  %s8 = sld [smem:[#allocation0]]
  $region50: #{_forward_impl.1} parent=0
    _
  %s10 = ssub.s32 1, %s8
  %s11 = scalar_select 0, %s10, %s8
  %v12 = vstv %s6
  %13 = vst [vmem:[#allocation2] sm:$0x1] %v12
  $region1: #{_forward_impl.1} parent=0
    #allocation3 [shape = 'u8[4096]{0}', space=vmem, size = 0x1000, scoped, tag = 'input window, operand 0, single buffered']
    #allocation4 [shape = 's32[1]{0}', space=sflag, size = 0x4, scoped, tag = 'scoped memory for _forward_impl.1']
    #allocation5 [shape = 'u8[8192]{0}', space=vmem, size = 0x2000, scoped, tag = 'input window, operand 1, single buffered']
    #allocation6 [shape = 's32[1]{0}', space=sflag, size = 0x4, scoped, tag = 'scoped memory for _forward_impl.1']
    #allocation7 [shape = 'u8[32768]{0}', space=vmem, size = 0x8000, scoped, tag = 'input window, operand 3, single buffered']
    %14 = vsyncpa [#allocation4], 0
    %15 = vsyncpa [#allocation6], 0
    // Predicated region
    $region2: #{_forward_impl.1} parent=1 // pred_check
      _
    $region3: #{_forward_impl.1} parent=1 // pred_check_branch
      %17 = sbr.rel (0) target = $region5
    $region4: #{_forward_impl.1} parent=1 // pred_region
      %s19 = ssub.s32 128, 128
      %20 = vsyncadd [#allocation4], %s19
      %s22 = sshll.u32 [#allocation3], 4
      %s23 = int_to_ptr.vmem [resolvable:$true] %s22
      %25 = dma.hbm_to_vmem [thread:$0]  %s0, 128, %s23, [#allocation4]
    $region5: #{_forward_impl.1} parent=1 // pred_fallthru
      _
    // Predicated region
    $region6: #{_forward_impl.1} parent=1 // pred_check
      _
    $region7: #{_forward_impl.1} parent=1 // pred_check_branch
      %27 = sbr.rel (0) target = $region9
    $region8: #{_forward_impl.1} parent=1 // pred_region
      %s29 = ssub.s32 256, 256
      %30 = vsyncadd [#allocation6], %s29
      %s31 = sshll.u32 [#allocation5], 4
      %s32 = int_to_ptr.vmem [resolvable:$true] %s31
      %37 = dma.hbm_to_vmem [thread:$0]  %s1, 256, %s32, [#allocation6], 64, 64, 4
    $region9: #{_forward_impl.1} parent=1 // pred_fallthru
      _
    // Predicated region
    $region10: #{_forward_impl.1} parent=1 // pred_check
      _
    $region11: #{_forward_impl.1} parent=1 // pred_check_branch
      %39 = sbr.rel (0) target = $region13
    $region12: #{_forward_impl.1} parent=1 // pred_region
      _
    $region13: #{_forward_impl.1} parent=1 // pred_fallthru
      _
    // Predicated region
    $region14: #{_forward_impl.1} parent=1 // pred_check
      _
    $region15: #{_forward_impl.1} parent=1 // pred_check_branch
      %41 = sbr.rel (0) target = $region17
    $region16: #{_forward_impl.1} parent=1 // pred_region
      %s43 = ssub.s32 1024, 1024
      %44 = vsyncadd [#allocation6], %s43
      %s45 = sshll.u32 [#allocation7], 4
      %s46 = int_to_ptr.vmem [resolvable:$true] %s45
      %51 = dma.hbm_to_vmem [thread:$0]  %s3, 1024, %s46, [#allocation6], 64, 64, 4
    $region17: #{_forward_impl.1} parent=1 // pred_fallthru
      _
    // Predicated region
    $region18: #{_forward_impl.1} parent=1 // pred_check
      _
    $region19: #{_forward_impl.1} parent=1 // pred_check_branch
      %53 = sbr.rel (0) target = $region21
    $region20: #{_forward_impl.1} parent=1 // pred_region
      _
    $region21: #{_forward_impl.1} parent=1 // pred_fallthru
      _
    // Predicated region
    $region22: #{_forward_impl.1} parent=1 // pred_check
      _
    $region23: #{_forward_impl.1} parent=1 // pred_check_branch
      %55 = sbr.rel (0) target = $region25
    $region24: #{_forward_impl.1} parent=1 // pred_region
      _
    $region25: #{_forward_impl.1} parent=1 // pred_fallthru
      _
    // Predicated region
    $region26: #{_forward_impl.1} parent=1 // pred_check
      _
    $region27: #{_forward_impl.1} parent=1 // pred_check_branch
      %57 = sbr.rel (0) target = $region29
    $region28: #{_forward_impl.1} parent=1 // pred_region
      _
    $region29: #{_forward_impl.1} parent=1 // pred_fallthru
      _
    // Predicated region
    $region30: #{_forward_impl.1} parent=1 // pred_check
      _
    $region31: #{_forward_impl.1} parent=1 // pred_check_branch
      %59 = sbr.rel (0) target = $region33
    $region32: #{_forward_impl.1} parent=1 // pred_region
      %60 = dma.done [#allocation4], 128
    $region33: #{_forward_impl.1} parent=1 // pred_fallthru
      _
    // Predicated region
    $region34: #{_forward_impl.1} parent=1 // pred_check
      _
    $region35: #{_forward_impl.1} parent=1 // pred_check_branch
      %62 = sbr.rel (0) target = $region37
    $region36: #{_forward_impl.1} parent=1 // pred_region
      %63 = dma.done [#allocation6], 256
    $region37: #{_forward_impl.1} parent=1 // pred_fallthru
      _
    // Predicated region
    $region38: #{_forward_impl.1} parent=1 // pred_check
      _
    $region39: #{_forward_impl.1} parent=1 // pred_check_branch
      %65 = sbr.rel (0) target = $region41
    $region40: #{_forward_impl.1} parent=1 // pred_region
      %66 = dma.done [#allocation6], 1024
    $region41: #{_forward_impl.1} parent=1 // pred_fallthru
      _
    %v68 = vld [vmem:[#allocation3] sm:$0xff]
    %v69 = vpack.c.bf16 %v68, %v68
    %v70 = vld [vmem:[#allocation5] sm:$0xf]
    %v71 = vld [vmem:[#allocation5 + $0x4] sm:$0xf]
    %v72 = vld [vmem:[#allocation5 + $0x8] sm:$0xf]
    %v73 = vld [vmem:[#allocation5 + $0xc] sm:$0xf]
    %v74 = vld [vmem:[%s2] sm:$0x1]
    %v76 = vlaneseq
    %v77 = vshrl.u32 %v76, 7
    %v78 = vsub.s32 0, %v77
    %v79 = vrot.slane %v74, %v78
    %v85 = vunpack.c.l.b16 %v70
    %v86 = vunpack.c.l.b16 %v71
    %v87 = vunpack.c.l.b16 %v72
    %v88 = vunpack.c.l.b16 %v73
    %v89 = vpack.c.b16 %v86, %v85
    %v90 = vpack.c.b16 %v88, %v87
    %vm93 = vcmask 261120
    %v95 = vsel %vm93, %v69, 0
    %97 = vmatprep.subr.bf16.mxu0 0
    %98 = vmatpush1.bf16.msra.mxu0 %v89
    %99 = vmatprep.subr.bf16.mxu0 0
    %100 = vmatpush1.bf16.msra.mxu0 %v90
    %101 = vmatprep.subr.bf16.mxu0 0
    %102 = vmatpush1.bf16.msra.mxu0 0
    %103 = vmatprep.subr.bf16.mxu0 0
    %104 = vmatpush1.bf16.msra.mxu0 0
    %105 = vmatprep.subr.bf16.mxu0 0
    %106 = vmatpush1.bf16.msra.mxu0 0
    %107 = vmatprep.subr.bf16.mxu0 0
    %108 = vmatpush1.bf16.msra.mxu0 0
    %109 = vmatprep.subr.bf16.mxu0 0
    %110 = vmatpush1.bf16.msra.mxu0 0
    %111 = vmatprep.subr.bf16.mxu0 0
    %112 = vmatpush1.bf16.msra.mxu0 0
    %113 = vmatprep.subr.bf16.mxu0 0
    %114 = vmatpush1.bf16.msra.mxu0 0
    %115 = vmatprep.subr.bf16.mxu0 0
    %116 = vmatpush1.bf16.msra.mxu0 0
    %117 = vmatprep.subr.bf16.mxu0 0
    %118 = vmatpush1.bf16.msra.mxu0 0
    %119 = vmatprep.subr.bf16.mxu0 0
    %120 = vmatpush1.bf16.msra.mxu0 0
    %121 = vmatprep.subr.bf16.mxu0 0
    %122 = vmatpush1.bf16.msra.mxu0 0
    %123 = vmatprep.subr.bf16.mxu0 0
    %124 = vmatpush1.bf16.msra.mxu0 0
    %125 = vmatprep.subr.bf16.mxu0 0
    %126 = vmatpush1.bf16.msra.mxu0 0
    %127 = vmatprep.subr.bf16.mxu0 0
    %128 = vmatpush1.bf16.msra.mxu0 0
    %129 = vmatprep.mubr.bf16.mxu0 0
    %130 = vmatmul.mubr.bf16.gmra.mrb[0].mxu0 %v95
    %v131 = vpop.f32.mrb[0].mxu0
    %v132 = vadd.f32 %v79, %v131
    %v133 = vpop.f32.mrb[0].mxu0
    %v134 = vpop.f32.mrb[0].mxu0
    %v135 = vpop.f32.mrb[0].mxu0
    %136 = vdwg.mxu0
    %v137 = vmax.f32 %v132, 0.0
    %v138 = vpack.c.bf16 %v137, %v137
    %v139 = vld [vmem:[#allocation7] sm:$0xf]
    %v140 = vld [vmem:[#allocation7 + $0x4] sm:$0xf]
    %v141 = vld [vmem:[#allocation7 + $0x8] sm:$0xf]
    %v142 = vld [vmem:[#allocation7 + $0xc] sm:$0xf]
    %v143 = vld [vmem:[#allocation7 + $0x10] sm:$0xf]
    %v144 = vld [vmem:[#allocation7 + $0x14] sm:$0xf]
    %v145 = vld [vmem:[#allocation7 + $0x18] sm:$0xf]
    %v146 = vld [vmem:[#allocation7 + $0x1c] sm:$0xf]
    %v147 = vld [vmem:[#allocation7 + $0x20] sm:$0xf]
    %v148 = vld [vmem:[#allocation7 + $0x24] sm:$0xf]
    %v149 = vld [vmem:[#allocation7 + $0x28] sm:$0xf]
    %v150 = vld [vmem:[#allocation7 + $0x2c] sm:$0xf]
    %v151 = vld [vmem:[#allocation7 + $0x30] sm:$0xf]
    %v152 = vld [vmem:[#allocation7 + $0x34] sm:$0xf]
    %v153 = vld [vmem:[#allocation7 + $0x38] sm:$0xf]
    %v154 = vld [vmem:[#allocation7 + $0x3c] sm:$0xf]
    %v155 = vld [vmem:[%s4] sm:$0x1]
    %v157 = vlaneseq
    %v158 = vshrl.u32 %v157, 7
    %v159 = vsub.s32 0, %v158
    %v160 = vrot.slane %v155, %v159
    %v178 = vunpack.c.l.b16 %v139
    %v179 = vunpack.c.l.b16 %v140
    %v180 = vunpack.c.l.b16 %v141
    %v181 = vunpack.c.l.b16 %v142
    %v182 = vunpack.c.l.b16 %v143
    %v183 = vunpack.c.l.b16 %v144
    %v184 = vunpack.c.l.b16 %v145
    %v185 = vunpack.c.l.b16 %v146
    %v186 = vunpack.c.l.b16 %v147
    %v187 = vunpack.c.l.b16 %v148
    %v188 = vunpack.c.l.b16 %v149
    %v189 = vunpack.c.l.b16 %v150
    %v190 = vunpack.c.l.b16 %v151
    %v191 = vunpack.c.l.b16 %v152
    %v192 = vunpack.c.l.b16 %v153
    %v193 = vunpack.c.l.b16 %v154
    %v194 = vpack.c.b16 %v179, %v178
    %v195 = vpack.c.b16 %v181, %v180
    %v196 = vpack.c.b16 %v183, %v182
    %v197 = vpack.c.b16 %v185, %v184
    %v198 = vpack.c.b16 %v187, %v186
    %v199 = vpack.c.b16 %v189, %v188
    %v200 = vpack.c.b16 %v191, %v190
    %v201 = vpack.c.b16 %v193, %v192
    %210 = vmatprep.subr.bf16.mxu0 0
    %211 = vmatpush1.bf16.msra.mxu0 %v194
    %212 = vmatprep.subr.bf16.mxu0 0
    %213 = vmatpush1.bf16.msra.mxu0 %v195
    %214 = vmatprep.subr.bf16.mxu0 0
    %215 = vmatpush1.bf16.msra.mxu0 %v196
    %216 = vmatprep.subr.bf16.mxu0 0
    %217 = vmatpush1.bf16.msra.mxu0 %v197
    %218 = vmatprep.subr.bf16.mxu0 0
    %219 = vmatpush1.bf16.msra.mxu0 %v198
    %220 = vmatprep.subr.bf16.mxu0 0
    %221 = vmatpush1.bf16.msra.mxu0 %v199
    %222 = vmatprep.subr.bf16.mxu0 0
    %223 = vmatpush1.bf16.msra.mxu0 %v200
    %224 = vmatprep.subr.bf16.mxu0 0
    %225 = vmatpush1.bf16.msra.mxu0 %v201
    %226 = vmatprep.subr.bf16.mxu0 0
    %227 = vmatpush1.bf16.msra.mxu0 0
    %228 = vmatprep.subr.bf16.mxu0 0
    %229 = vmatpush1.bf16.msra.mxu0 0
    %230 = vmatprep.subr.bf16.mxu0 0
    %231 = vmatpush1.bf16.msra.mxu0 0
    %232 = vmatprep.subr.bf16.mxu0 0
    %233 = vmatpush1.bf16.msra.mxu0 0
    %234 = vmatprep.subr.bf16.mxu0 0
    %235 = vmatpush1.bf16.msra.mxu0 0
    %236 = vmatprep.subr.bf16.mxu0 0
    %237 = vmatpush1.bf16.msra.mxu0 0
    %238 = vmatprep.subr.bf16.mxu0 0
    %239 = vmatpush1.bf16.msra.mxu0 0
    %240 = vmatprep.subr.bf16.mxu0 0
    %241 = vmatpush1.bf16.msra.mxu0 0
    %242 = vmatprep.mubr.bf16.mxu0 0
    %243 = vmatmul.mubr.bf16.gmra.mrb[0].mxu0 %v138
    %v244 = vpop.f32.mrb[0].mxu0
    %v245 = vadd.f32 %v160, %v244
    %v246 = vpop.f32.mrb[0].mxu0
    %v247 = vpop.f32.mrb[0].mxu0
    %v248 = vpop.f32.mrb[0].mxu0
    %249 = vdwg.mxu0
    %v250 = vmax.f32 %v245, 0.0
    %v251 = vld [vmem:[%s5] sm:$0x1]
    %v253 = vlaneseq
    %v254 = vshrl.u32 %v253, 7
    %v255 = vsub.s32 0, %v254
    %v256 = vrot.slane %v251, %v255
    %v258 = vmul.f32 %v250, %v256
    %259 = vadd.xlane.f32.xlu0 %v258
    %v260 = vpop.xlane.xlu0 %259
    %v261 = vld [vmem:[#allocation2] sm:$0x1]
    %v263 = vlaneseq
    %v264 = vshrl.u32 %v263, 7
    %v265 = vsub.s32 0, %v264
    %v266 = vrot.slane %v261, %v265
    %v268 = vadd.f32 %v260, %v266
    %v269 = vxor.u32 %v268, 2147483648
    %v270 = vmul.f32 %v269, 1.442695
    %v271 = vpow.pop %v270
    %v272 = vadd.f32 %v271, 1.0
    %v273 = vrcp.pop %v272
    %v274 = vmul.f32 1.0, %v273
    %vm275 = vcmask 7168
    %276 = vst.msk [vmem:[%s7] sm:$0xff] %vm275, %v274
    // Predicated region
    $region42: #{_forward_impl.1} parent=1 // pred_check
      _
    $region43: #{_forward_impl.1} parent=1 // pred_check_branch
      %278 = sbr.rel (0) target = $region45
    $region44: #{_forward_impl.1} parent=1 // pred_region
      _
    $region45: #{_forward_impl.1} parent=1 // pred_fallthru
      _
    // Predicated region
    $region46: #{_forward_impl.1} parent=1 // pred_check
      _
    $region47: #{_forward_impl.1} parent=1 // pred_check_branch
      %280 = sbr.rel (0) target = $region49
    $region48: #{_forward_impl.1} parent=1 // pred_region
      _
    $region49: #{_forward_impl.1} parent=1 // pred_fallthru
      _
    %281 = vsyncpa [#allocation4], 1
    %282 = vsyncpa [#allocation6], 1

</llo_original>
